<compile_context>
chip_gen: v5e
topology: v5e:2x2
jax: 0.10.0
libtpu: 0.0.40
codegen_flags: <defaults>
</compile_context>

<pallas_src>
import functools

import jax
import jax.numpy as jnp
from jax import lax
from jax.experimental import pallas as pl
from jax.experimental.pallas import tpu as pltpu

B, S, D_MODEL, D_FF = 2, 8, 32, 64
LN_EPS = 1e-5          # PyTorch nn.LayerNorm default
TILE_M = 256           # row-tile at real scale; shrinks for tiny inputs


def _round_up(x, m):
    return ((x + m - 1) // m) * m


def ffn_kernel(x_ref, w1_ref, w2_ref, b2_ref, g_ref, beta_ref, out_ref):
    x = x_ref[...]                                                  # [TILE_M, D] f32

    # Feed-forward: Linear(no bias) -> ReLU -> Linear(+bias).  bf16 MXU inputs,
    # f32 accumulation.
    h = jnp.dot(x.astype(jnp.bfloat16), w1_ref[...],
                preferred_element_type=jnp.float32)                 # [TILE_M, D_FF]
    h = jnp.maximum(h, 0.0)
    o = jnp.dot(h.astype(jnp.bfloat16), w2_ref[...],
                preferred_element_type=jnp.float32)                 # [TILE_M, D]
    o = o + b2_ref[...] + x                                         # bias + residual (f32)

    # LayerNorm over the feature axis, single-pass stats (biased variance, like torch).
    d = o.shape[-1]
    inv_d = 1.0 / d
    s1 = jnp.sum(o, axis=-1, keepdims=True)
    s2 = jnp.sum(o * o, axis=-1, keepdims=True)
    mu = s1 * inv_d
    var = s2 * inv_d - mu * mu
    out_ref[...] = (o - mu) * lax.rsqrt(var + LN_EPS) * g_ref[...] + beta_ref[...]


@functools.partial(jax.jit, static_argnames=("tile_m",))
def poswise_ffn(x, params, *, tile_m=TILE_M):
    """x: [B, S, D_MODEL] (f32). params: (w1, w2, b2, gamma, beta) all f32."""
    w1, w2, b2, gamma, beta = params
    Bn, Sn, Dn = x.shape
    d_ff = w1.shape[1]
    M = Bn * Sn

    # Flatten batch/seq -> rows; pad rows to the tile size (multiple of 8 sublanes).
    x2 = x.reshape(M, Dn).astype(jnp.float32)
    tm = min(tile_m, _round_up(M, 8))
    m_pad = _round_up(M, tm)
    if m_pad != M:
        x2 = jnp.pad(x2, ((0, m_pad - M), (0, 0)))
    grid = (m_pad // tm,)

    # Cast weights to bf16 wrapper-side: halves HBM->VMEM weight traffic.
    w1_bf = w1.astype(jnp.bfloat16)
    w2_bf = w2.astype(jnp.bfloat16)

    cost = pl.CostEstimate(
        flops=4 * m_pad * Dn * d_ff + 10 * m_pad * Dn,
        transcendentals=m_pad,                       # one rsqrt per row
        bytes_accessed=(x2.size * 4 + w1_bf.size * 2 + w2_bf.size * 2
                        + (b2.size + gamma.size + beta.size) * 4
                        + m_pad * Dn * 4),
    )

    vmem = pltpu.MemorySpace.VMEM
    out2 = pl.pallas_call(
        ffn_kernel,
        out_shape=jax.ShapeDtypeStruct((m_pad, Dn), jnp.float32),
        grid_spec=pltpu.PrefetchScalarGridSpec(
            num_scalar_prefetch=0,
            grid=grid,
            in_specs=[
                # activations: tiled over rows
                pl.BlockSpec((tm, Dn), lambda i: (i, 0), memory_space=vmem),
                # weights / bias / LN params: resident across the whole grid
                pl.BlockSpec((Dn, d_ff), lambda i: (0, 0), memory_space=vmem),
                pl.BlockSpec((d_ff, Dn), lambda i: (0, 0), memory_space=vmem),
                pl.BlockSpec((1, Dn), lambda i: (0, 0), memory_space=vmem),
                pl.BlockSpec((1, Dn), lambda i: (0, 0), memory_space=vmem),
                pl.BlockSpec((1, Dn), lambda i: (0, 0), memory_space=vmem),
            ],
            out_specs=pl.BlockSpec((tm, Dn), lambda i: (i, 0), memory_space=vmem),
        ),
        compiler_params=pltpu.CompilerParams(
            dimension_semantics=("parallel",),       # row tiles shard across TCs (v7x)
        ),
        cost_estimate=cost,
    )(x2, w1_bf, w2_bf, b2, gamma, beta)

    return out2[:M].reshape(Bn, Sn, Dn)


def ref_forward_f32(x, params):
    """Pure-f32 JAX reference reproducing the PyTorch forward exactly."""
    w1, w2, b2, gamma, beta = params
    h = jnp.maximum(x @ w1, 0.0) @ w2 + b2[0]
    o = h + x
    mu = o.mean(-1, keepdims=True)
    var = ((o - mu) ** 2).mean(-1, keepdims=True)
    return (o - mu) / jnp.sqrt(var + LN_EPS) * gamma[0] + beta[0]


def ref_forward_matched(x, params):
    """Reference matching the kernel's bf16-matmul / f32-accumulate numerics."""
    w1, w2, b2, gamma, beta = params
    h = jnp.dot(x.astype(jnp.bfloat16), w1.astype(jnp.bfloat16),
                preferred_element_type=jnp.float32)
    h = jnp.maximum(h, 0.0)
    o = jnp.dot(h.astype(jnp.bfloat16), w2.astype(jnp.bfloat16),
                preferred_element_type=jnp.float32) + b2[0] + x
    mu = o.mean(-1, keepdims=True)
    var = ((o - mu) ** 2).mean(-1, keepdims=True)
    return (o - mu) / jnp.sqrt(var + LN_EPS) * gamma[0] + beta[0]


if __name__ == "__main__":
    key = jax.random.PRNGKey(0)
    keys = jax.random.split(key, 6)

    x = jax.random.normal(keys[0], (B, S, D_MODEL), jnp.float32)

    scale = 0.1
    params = (
        scale * jax.random.normal(keys[1], (D_MODEL, D_FF), jnp.float32),   # W1 (no bias)
        scale * jax.random.normal(keys[2], (D_FF, D_MODEL), jnp.float32),   # W2
        scale * jax.random.normal(keys[3], (1, D_MODEL), jnp.float32),      # b2
        jnp.ones((1, D_MODEL), jnp.float32),                                # LN gamma
        jnp.zeros((1, D_MODEL), jnp.float32),                               # LN beta
    )

    out = poswise_ffn(x, params)
    jax.block_until_ready(out)
    assert out.shape == (B, S, D_MODEL)

    # Tight check vs. a reference with identical bf16-matmul numerics.
    out_matched = ref_forward_matched(x, params)
    assert jnp.allclose(out, out_matched, atol=1e-4, rtol=1e-4), "kernel mismatch (bf16-matched ref)"

    # Loose check vs. the full-f32 PyTorch-equivalent reference (bf16 matmul tolerance).
    out_f32 = ref_forward_f32(x, params)
    assert jnp.allclose(out, out_f32, atol=3e-2, rtol=0), "kernel drifted from f32 reference"

    print("KERNEL_OK")
</pallas_src>

<mosaic_0001>
module attributes {stable_mosaic.version = 11 : i64} {
  func.func @ffn_kernel(%arg0: i32, %arg1: memref<16x32xf32, #tpu.memory_space<vmem>>, %arg2: memref<32x64xbf16, #tpu.memory_space<vmem>>, %arg3: memref<64x32xbf16, #tpu.memory_space<vmem>>, %arg4: memref<1x32xf32, #tpu.memory_space<vmem>>, %arg5: memref<1x32xf32, #tpu.memory_space<vmem>>, %arg6: memref<1x32xf32, #tpu.memory_space<vmem>>, %arg7: memref<16x32xf32, #tpu.memory_space<vmem>>) attributes {dimension_semantics = [#tpu.dimension_semantics<parallel>], iteration_bounds = array<i64: 1>, scalar_prefetch = 0 : i64, scratch_operands = 0 : i64, tpu.core_type = #tpu.core_type<tc>, window_params = [{transform_indices = @transform_0, window_bounds = array<i64: 16, 32>}, {pipeline_mode = #tpu.pipeline_mode<synchronous>, transform_indices = @transform_1, window_bounds = array<i64: 32, 64>}, {pipeline_mode = #tpu.pipeline_mode<synchronous>, transform_indices = @transform_2, window_bounds = array<i64: 64, 32>}, {pipeline_mode = #tpu.pipeline_mode<synchronous>, transform_indices = @transform_3, window_bounds = array<i64: 1, 32>}, {pipeline_mode = #tpu.pipeline_mode<synchronous>, transform_indices = @transform_4, window_bounds = array<i64: 1, 32>}, {pipeline_mode = #tpu.pipeline_mode<synchronous>, transform_indices = @transform_5, window_bounds = array<i64: 1, 32>}, {transform_indices = @transform_6, window_bounds = array<i64: 16, 32>}]} {
    %c0 = arith.constant 0 : index
    %c0_0 = arith.constant 0 : index
    %0 = vector.load %arg1[%c0, %c0_0] : memref<16x32xf32, #tpu.memory_space<vmem>>, vector<16x32xf32>
    %1 = arith.truncf %0 : vector<16x32xf32> to vector<16x32xbf16>
    %c0_1 = arith.constant 0 : index
    %c0_2 = arith.constant 0 : index
    %2 = vector.load %arg2[%c0_1, %c0_2] : memref<32x64xbf16, #tpu.memory_space<vmem>>, vector<32x64xbf16>
    %cst = arith.constant dense<0.000000e+00> : vector<16x64xf32>
    %3 = tpu.matmul %1, %2, %cst {dimension_numbers = #tpu.dot_dimension_numbers<[1], [0], [0], [1], [0, 0, 1, 1], [], []>} : vector<16x32xbf16>, vector<32x64xbf16>, vector<16x64xf32> -> vector<16x64xf32>
    %cst_3 = arith.constant 0.000000e+00 : f32
    %4 = vector.broadcast %cst_3 : f32 to vector<16x64xf32>
    %5 = arith.maximumf %3, %4 : vector<16x64xf32>
    %6 = arith.truncf %5 : vector<16x64xf32> to vector<16x64xbf16>
    %c0_4 = arith.constant 0 : index
    %c0_5 = arith.constant 0 : index
    %7 = vector.load %arg3[%c0_4, %c0_5] : memref<64x32xbf16, #tpu.memory_space<vmem>>, vector<64x32xbf16>
    %cst_6 = arith.constant dense<0.000000e+00> : vector<16x32xf32>
    %8 = tpu.matmul %6, %7, %cst_6 {dimension_numbers = #tpu.dot_dimension_numbers<[1], [0], [0], [1], [0, 0, 1, 1], [], []>} : vector<16x64xbf16>, vector<64x32xbf16>, vector<16x32xf32> -> vector<16x32xf32>
    %c0_7 = arith.constant 0 : index
    %c0_8 = arith.constant 0 : index
    %9 = vector.load %arg4[%c0_7, %c0_8] : memref<1x32xf32, #tpu.memory_space<vmem>>, vector<1x32xf32>
    %10 = vector.broadcast %9 : vector<1x32xf32> to vector<16x32xf32>
    %11 = arith.addf %8, %10 : vector<16x32xf32>
    %12 = arith.addf %11, %0 : vector<16x32xf32>
    %cst_9 = arith.constant dense<0.000000e+00> : vector<16xf32>
    %13 = vector.multi_reduction <add>, %12, %cst_9 [1] : vector<16x32xf32> to vector<16xf32>
    %14 = vector.shape_cast %13 : vector<16xf32> to vector<16x1xf32>
    %15 = arith.mulf %12, %12 : vector<16x32xf32>
    %cst_10 = arith.constant dense<0.000000e+00> : vector<16xf32>
    %16 = vector.multi_reduction <add>, %15, %cst_10 [1] : vector<16x32xf32> to vector<16xf32>
    %17 = vector.shape_cast %16 : vector<16xf32> to vector<16x1xf32>
    %cst_11 = arith.constant 3.125000e-02 : f32
    %18 = vector.broadcast %cst_11 : f32 to vector<16x1xf32>
    %19 = arith.mulf %14, %18 : vector<16x1xf32>
    %cst_12 = arith.constant 3.125000e-02 : f32
    %20 = vector.broadcast %cst_12 : f32 to vector<16x1xf32>
    %21 = arith.mulf %17, %20 : vector<16x1xf32>
    %22 = arith.mulf %19, %19 : vector<16x1xf32>
    %23 = arith.subf %21, %22 : vector<16x1xf32>
    %24 = vector.broadcast %19 : vector<16x1xf32> to vector<16x32xf32>
    %25 = arith.subf %12, %24 : vector<16x32xf32>
    %cst_13 = arith.constant 9.99999974E-6 : f32
    %26 = vector.broadcast %cst_13 : f32 to vector<16x1xf32>
    %27 = arith.addf %23, %26 : vector<16x1xf32>
    %28 = math.rsqrt %27 : vector<16x1xf32>
    %29 = vector.broadcast %28 : vector<16x1xf32> to vector<16x32xf32>
    %30 = arith.mulf %25, %29 : vector<16x32xf32>
    %c0_14 = arith.constant 0 : index
    %c0_15 = arith.constant 0 : index
    %31 = vector.load %arg5[%c0_14, %c0_15] : memref<1x32xf32, #tpu.memory_space<vmem>>, vector<1x32xf32>
    %32 = vector.broadcast %31 : vector<1x32xf32> to vector<16x32xf32>
    %33 = arith.mulf %30, %32 : vector<16x32xf32>
    %c0_16 = arith.constant 0 : index
    %c0_17 = arith.constant 0 : index
    %34 = vector.load %arg6[%c0_16, %c0_17] : memref<1x32xf32, #tpu.memory_space<vmem>>, vector<1x32xf32>
    %35 = vector.broadcast %34 : vector<1x32xf32> to vector<16x32xf32>
    %36 = arith.addf %33, %35 : vector<16x32xf32>
    %c0_18 = arith.constant 0 : index
    %c0_19 = arith.constant 0 : index
    %37 = vector.load %arg7[%c0_18, %c0_19] : memref<16x32xf32, #tpu.memory_space<vmem>>, vector<16x32xf32>
    tpu.vector_store %arg7[%c0_18, %c0_19], %36 {strides = array<i32>} : memref<16x32xf32, #tpu.memory_space<vmem>>, vector<16x32xf32>,
    return
  }
  func.func @transform_0(%arg0: i32) -> (i32, i32) {
    %c0_i32 = arith.constant 0 : i32
    %c0_i32_0 = arith.constant 0 : i32
    return %arg0, %c0_i32 : i32, i32
  }
  func.func @transform_1(%arg0: i32) -> (i32, i32) {
    %c0_i32 = arith.constant 0 : i32
    %c0_i32_0 = arith.constant 0 : i32
    %c0_i32_1 = arith.constant 0 : i32
    return %c0_i32, %c0_i32_0 : i32, i32
  }
  func.func @transform_2(%arg0: i32) -> (i32, i32) {
    %c0_i32 = arith.constant 0 : i32
    %c0_i32_0 = arith.constant 0 : i32
    %c0_i32_1 = arith.constant 0 : i32
    return %c0_i32, %c0_i32_0 : i32, i32
  }
  func.func @transform_3(%arg0: i32) -> (i32, i32) {
    %c0_i32 = arith.constant 0 : i32
    %c0_i32_0 = arith.constant 0 : i32
    %c0_i32_1 = arith.constant 0 : i32
    return %c0_i32, %c0_i32_0 : i32, i32
  }
  func.func @transform_4(%arg0: i32) -> (i32, i32) {
    %c0_i32 = arith.constant 0 : i32
    %c0_i32_0 = arith.constant 0 : i32
    %c0_i32_1 = arith.constant 0 : i32
    return %c0_i32, %c0_i32_0 : i32, i32
  }
  func.func @transform_5(%arg0: i32) -> (i32, i32) {
    %c0_i32 = arith.constant 0 : i32
    %c0_i32_0 = arith.constant 0 : i32
    %c0_i32_1 = arith.constant 0 : i32
    return %c0_i32, %c0_i32_0 : i32, i32
  }
  func.func @transform_6(%arg0: i32) -> (i32, i32) {
    %c0_i32 = arith.constant 0 : i32
    %c0_i32_0 = arith.constant 0 : i32
    return %arg0, %c0_i32 : i32, i32
  }
}

</mosaic_0001>

<llo_original>
// kernel: poswise_ffn.1
$region0: #{poswise_ffn.1}
  #allocation0 [shape = 'u32[]', space=smem, size = 0x4, offset = 0x4, fixed_abs, tag = 'smem constant byte address 0x4 - core index']
  #allocation1 [shape = 'u32[72,128]{1,0:T(1,128)}', space=vmem, size = 0x9000, scoped, tag = 'internal scratch']
  %s0 = inlined_call_operand.vmem [shape: f32[16,32], index: 0, kind: input, shape index: {}]
  %s1 = inlined_call_operand.vmem [shape: bf16[32,64], index: 1, kind: input, shape index: {}]
  %s2 = inlined_call_operand.vmem [shape: bf16[64,32], index: 2, kind: input, shape index: {}]
  %s3 = inlined_call_operand.vmem [shape: f32[1,32], index: 3, kind: input, shape index: {}]
  %s4 = inlined_call_operand.vmem [shape: f32[1,32], index: 4, kind: input, shape index: {}]
  %s5 = inlined_call_operand.vmem [shape: f32[1,32], index: 5, kind: input, shape index: {}]
  %s6 = inlined_call_operand.hbm [shape: f32[16,32], index: 6, kind: output, shape index: {}]
  %s7 = sld [smem:[#allocation0]]
  $region34: #{poswise_ffn.1} parent=0
    _
  %s9 = ssub.s32 1, %s7
  %s10 = scalar_select 0, %s9, %s7
  $region1: #{poswise_ffn.1} parent=0
    #allocation2 [shape = 'u8[8192]{0}', space=vmem, size = 0x2000, scoped, tag = 'output window, operand 0, single buffered']
    #allocation3 [shape = 's32[1]{0}', space=sflag, size = 0x4, scoped, tag = 'scoped memory for poswise_ffn.1']
    %11 = vsyncpa [#allocation3], 0
    // Predicated region
    $region2: #{poswise_ffn.1} parent=1 // pred_check
      _
    $region3: #{poswise_ffn.1} parent=1 // pred_check_branch
      %13 = sbr.rel (0) target = $region5
    $region4: #{poswise_ffn.1} parent=1 // pred_region
      _
    $region5: #{poswise_ffn.1} parent=1 // pred_fallthru
      _
    // Predicated region
    $region6: #{poswise_ffn.1} parent=1 // pred_check
      _
    $region7: #{poswise_ffn.1} parent=1 // pred_check_branch
      %15 = sbr.rel (0) target = $region9
    $region8: #{poswise_ffn.1} parent=1 // pred_region
      _
    $region9: #{poswise_ffn.1} parent=1 // pred_fallthru
      _
    // Predicated region
    $region10: #{poswise_ffn.1} parent=1 // pred_check
      _
    $region11: #{poswise_ffn.1} parent=1 // pred_check_branch
      %17 = sbr.rel (0) target = $region13
    $region12: #{poswise_ffn.1} parent=1 // pred_region
      _
    $region13: #{poswise_ffn.1} parent=1 // pred_fallthru
      _
    // Predicated region
    $region14: #{poswise_ffn.1} parent=1 // pred_check
      _
    $region15: #{poswise_ffn.1} parent=1 // pred_check_branch
      %19 = sbr.rel (0) target = $region17
    $region16: #{poswise_ffn.1} parent=1 // pred_region
      _
    $region17: #{poswise_ffn.1} parent=1 // pred_fallthru
      _
    // Predicated region
    $region18: #{poswise_ffn.1} parent=1 // pred_check
      _
    $region19: #{poswise_ffn.1} parent=1 // pred_check_branch
      %21 = sbr.rel (0) target = $region21
    $region20: #{poswise_ffn.1} parent=1 // pred_region
      _
    $region21: #{poswise_ffn.1} parent=1 // pred_fallthru
      _
    // Predicated region
    $region22: #{poswise_ffn.1} parent=1 // pred_check
      _
    $region23: #{poswise_ffn.1} parent=1 // pred_check_branch
      %23 = sbr.rel (0) target = $region25
    $region24: #{poswise_ffn.1} parent=1 // pred_region
      _
    $region25: #{poswise_ffn.1} parent=1 // pred_fallthru
      _
    %v25 = vld [vmem:[%s0] sm:$0xff]
    %v26 = vld [vmem:[%s0 + $0x8] sm:$0xff]
    %v27 = vpack.c.bf16 %v26, %v25
    %v28 = vld [vmem:[%s1] sm:$0xf]
    %v29 = vld [vmem:[%s1 + $0x4] sm:$0xf]
    %v30 = vld [vmem:[%s1 + $0x8] sm:$0xf]
    %v31 = vld [vmem:[%s1 + $0xc] sm:$0xf]
    %v36 = vunpack.c.l.b16 %v28
    %v37 = vunpack.c.l.b16 %v29
    %v38 = vunpack.c.l.b16 %v30
    %v39 = vunpack.c.l.b16 %v31
    %v40 = vpack.c.b16 %v37, %v36
    %v41 = vpack.c.b16 %v39, %v38
    %vm44 = vcmask 261120
    %v46 = vsel %vm44, %v27, 0
    %48 = vmatpush.bf16.msra.mxu0 0
    %49 = vmatpush.bf16.msra.mxu0 0
    %50 = vmatpush.bf16.msra.mxu0 0
    %51 = vmatpush.bf16.msra.mxu0 0
    %52 = vmatpush.bf16.msra.mxu0 0
    %53 = vmatpush.bf16.msra.mxu0 0
    %54 = vmatpush.bf16.msra.mxu0 %v41
    %55 = vmatpush.bf16.msra.mxu0 %v40
    %56 = vmatmul.bf16.gmra.mxu0 %v46
    %v57 = vpop.f32.mrf.mxu0
    %v58 = vadd.f32 0.0, %v57
    %v59 = vpop.f32.mrf.mxu0
    %v60 = vadd.f32 0.0, %v59
    %61 = vdwg.mxu0
    %v62 = vmax.f32 %v58, 0.0
    %v63 = vmax.f32 %v60, 0.0
    %v64 = vpack.c.bf16 %v63, %v62
    %v65 = vld [vmem:[%s2] sm:$0xf]
    %v66 = vld [vmem:[%s2 + $0x4] sm:$0xf]
    %v67 = vld [vmem:[%s2 + $0x8] sm:$0xf]
    %v68 = vld [vmem:[%s2 + $0xc] sm:$0xf]
    %v69 = vld [vmem:[%s2 + $0x10] sm:$0xf]
    %v70 = vld [vmem:[%s2 + $0x14] sm:$0xf]
    %v71 = vld [vmem:[%s2 + $0x18] sm:$0xf]
    %v72 = vld [vmem:[%s2 + $0x1c] sm:$0xf]
    %v73 = vld [vmem:[%s3] sm:$0x1]
    %v75 = vperm.slane %v73, 0
    %v85 = vunpack.c.l.b16 %v65
    %v86 = vunpack.c.l.b16 %v66
    %v87 = vunpack.c.l.b16 %v67
    %v88 = vunpack.c.l.b16 %v68
    %v89 = vunpack.c.l.b16 %v69
    %v90 = vunpack.c.l.b16 %v70
    %v91 = vunpack.c.l.b16 %v71
    %v92 = vunpack.c.l.b16 %v72
    %v93 = vpack.c.b16 %v86, %v85
    %v94 = vpack.c.b16 %v88, %v87
    %v95 = vpack.c.b16 %v90, %v89
    %v96 = vpack.c.b16 %v92, %v91
    %vm101 = vcmask 523264
    %v103 = vsel %vm101, %v64, 0
    %105 = vmatpush.bf16.msra.mxu0 0
    %106 = vmatpush.bf16.msra.mxu0 0
    %107 = vmatpush.bf16.msra.mxu0 0
    %108 = vmatpush.bf16.msra.mxu0 0
    %109 = vmatpush.bf16.msra.mxu0 %v96
    %110 = vmatpush.bf16.msra.mxu0 %v95
    %111 = vmatpush.bf16.msra.mxu0 %v94
    %112 = vmatpush.bf16.msra.mxu0 %v93
    %113 = vmatmul.bf16.gmra.mxu0 %v103
    %v114 = vpop.f32.mrf.mxu0
    %v115 = vadd.f32 %v75, %v114
    %v116 = vpop.f32.mrf.mxu0
    %v117 = vadd.f32 %v75, %v116
    %118 = vdwg.mxu0
    %v119 = vadd.f32 %v115, %v25
    %v120 = vadd.f32 %v117, %v26
    %v121 = vsel %vm44, %v119, 0.0
    %122 = vadd.xlane.f32.xlu0 %v121
    %v123 = vpop.xlane.xlu0 %122
    %v124 = vsel %vm44, %v120, 0.0
    %125 = vadd.xlane.f32.xlu0 %v124
    %v126 = vpop.xlane.xlu0 %125
    %v127 = vmul.f32 %v119, %v119
    %v128 = vmul.f32 %v120, %v120
    %v129 = vsel %vm44, %v127, 0.0
    %130 = vadd.xlane.f32.xlu0 %v129
    %v131 = vpop.xlane.xlu0 %130
    %v132 = vsel %vm44, %v128, 0.0
    %133 = vadd.xlane.f32.xlu0 %v132
    %v134 = vpop.xlane.xlu0 %133
    %v135 = vmul.f32 %v123, 0.03125
    %v136 = vmul.f32 %v126, 0.03125
    %v137 = vmul.f32 %v131, 0.03125
    %v138 = vmul.f32 %v134, 0.03125
    %v139 = vmul.f32 %v135, %v135
    %v140 = vmul.f32 %v136, %v136
    %v141 = vsub.f32 %v137, %v139
    %v142 = vsub.f32 %v138, %v140
    %v143 = vsub.f32 %v119, %v135
    %v144 = vsub.f32 %v120, %v136
    %v145 = vadd.f32 %v141, 1e-05
    %v146 = vadd.f32 %v142, 1e-05
    %v147 = vrsqrt.pop %v145
    %v148 = vmul.f32 %v147, %v145
    %v149 = vmul.f32 %v148, %v147
    %v150 = vmul.f32 0.5, %v149
    %v151 = vsub.f32 1.5, %v150
    %v152 = vmul.f32 %v147, %v151
    %vm153 = vweird.f32 %v145
    %vm154 = vweird.f32 %v147
    %vm155 = vmor %vm153, %vm154
    %v156 = vsel %vm155, %v147, %v152
    %v157 = vrsqrt.pop %v146
    %v158 = vmul.f32 %v157, %v146
    %v159 = vmul.f32 %v158, %v157
    %v160 = vmul.f32 0.5, %v159
    %v161 = vsub.f32 1.5, %v160
    %v162 = vmul.f32 %v157, %v161
    %vm163 = vweird.f32 %v146
    %vm164 = vweird.f32 %v157
    %vm165 = vmor %vm163, %vm164
    %v166 = vsel %vm165, %v157, %v162
    %v167 = vmul.f32 %v143, %v156
    %v168 = vmul.f32 %v144, %v166
    %v169 = vld [vmem:[%s4] sm:$0x1]
    %v171 = vperm.slane %v169, 0
    %v173 = vmul.f32 %v167, %v171
    %v174 = vmul.f32 %v168, %v171
    %v175 = vld [vmem:[%s5] sm:$0x1]
    %v177 = vperm.slane %v175, 0
    %v179 = vadd.f32 %v173, %v177
    %v180 = vadd.f32 %v174, %v177
    %181 = vst.msk [vmem:[#allocation2] sm:$0xff] %vm44, %v179
    %182 = vst.msk [vmem:[#allocation2 + $0x8] sm:$0xff] %vm44, %v180
    // Predicated region
    $region26: #{poswise_ffn.1} parent=1 // pred_check
      _
    $region27: #{poswise_ffn.1} parent=1 // pred_check_branch
      %184 = sbr.rel (0) target = $region29
    $region28: #{poswise_ffn.1} parent=1 // pred_region
      %186 = vsyncadd [#allocation3], 0
      %s187 = sshll.u32 [#allocation2], 4
      %s188 = int_to_ptr.vmem [resolvable:$true] %s187
      %s189 = sshll.u32 %s6, 4
      %s190 = int_to_ptr.hbm [resolvable:$true] %s189
      %195 = dma.vmem_to_hbm [thread:$0]  %s188, 256, %s190, [#allocation3], 128, 128, 8
    $region29: #{poswise_ffn.1} parent=1 // pred_fallthru
      _
    // Predicated region
    $region30: #{poswise_ffn.1} parent=1 // pred_check
      _
    $region31: #{poswise_ffn.1} parent=1 // pred_check_branch
      %197 = sbr.rel (0) target = $region33
    $region32: #{poswise_ffn.1} parent=1 // pred_region
      %199 = dma.done [#allocation3], 256
    $region33: #{poswise_ffn.1} parent=1 // pred_fallthru
      _
    %200 = vsyncpa [#allocation3], 1

</llo_original>
